<compile_context>
chip_gen: v5e
topology: v5e:2x2
jax: 0.10.0
libtpu: 0.0.40
codegen_flags: <defaults>
</compile_context>

<pallas_src>
import math

import jax
import jax.numpy as jnp
from jax.experimental import pallas as pl
from jax.experimental.pallas import tpu as pltpu


def _pick_tile(dim, align, max_tile):
    """Largest multiple of `align` that evenly divides `dim`, capped at
    `max_tile`.  Falls back to the full dim (always a legal block size)."""
    if dim <= max_tile:
        return dim
    if dim % align == 0:
        t = (max_tile // align) * align
        while t >= align:
            if dim % t == 0:
                return t
            t -= align
    return dim


def eca_attention(x, conv_weight):
    """x: (B, C, H, W). conv_weight: (1, 1, k), no bias. Matches torch ECA."""
    B, C, H, W = x.shape
    HW = H * W
    k = conv_weight.shape[-1]
    pad = (k - 1) // 2
    itemsize = jnp.dtype(x.dtype).itemsize

    x_flat = x.reshape(B, C, HW)

    # Lane-dense tiles, a few hundred KiB .. ~1 MiB per block.
    thw = _pick_tile(HW, 128, 1024)
    tc = _pick_tile(C, 8, 256)
    n_hw = HW // thw
    n_c = C // tc
    inv_hw = 1.0 / float(HW)

    blk_bytes = tc * thw * itemsize

    def _vmem_limit(n_streams):
        # n_streams double-buffered blocks + f32 temporaries + margin.
        need = n_streams * 2 * blk_bytes + tc * thw * 4 + (2 << 20)
        return int(min(64 << 20, max(16 << 20, need)))

    # ---------------- Pass 1: spatial mean (f32 accumulation) ----------------
    def _pool_kernel(x_ref, mean_ref, acc_ref):
        h = pl.program_id(2)

        @pl.when(h == 0)
        def _init():
            acc_ref[...] = jnp.zeros_like(acc_ref)

        xb = x_ref[...]                                          # (tc, thw)
        acc_ref[...] += jnp.sum(xb.astype(jnp.float32), axis=1, keepdims=True)

        @pl.when(h == pl.num_programs(2) - 1)
        def _fin():
            mean_ref[...] = acc_ref[...] * inv_hw

    pooled = pl.pallas_call(
        _pool_kernel,
        out_shape=jax.ShapeDtypeStruct((B, C, 1), jnp.float32),
        grid_spec=pltpu.PrefetchScalarGridSpec(
            num_scalar_prefetch=0,
            grid=(B, n_c, n_hw),
            in_specs=[pl.BlockSpec((pl.Squeezed(), tc, thw),
                                   lambda b, c, h: (b, c, h))],
            out_specs=pl.BlockSpec((pl.Squeezed(), tc, 1),
                                   lambda b, c, h: (b, c, 0)),
            scratch_shapes=[pltpu.VMEM((tc, 1), jnp.float32)],
        ),
        compiler_params=pltpu.CompilerParams(
            dimension_semantics=("parallel", "parallel", "arbitrary"),
            vmem_limit_bytes=_vmem_limit(1)),
        cost_estimate=pl.CostEstimate(
            flops=B * C * HW,
            transcendentals=0,
            bytes_accessed=B * C * HW * itemsize + B * C * 4),
    )(x_flat)

    # ---- Glue: k-tap channel conv + sigmoid on the tiny (B, C) vector -------
    # O(B*C*k) work; done in plain JAX between the two bandwidth-bound passes
    # (replaces the old (C, C) band-matrix MXU matmul).
    w = conv_weight.reshape(k).astype(jnp.float32)
    p = pooled[:, :, 0]                                          # (B, C) f32
    p_pad = jnp.pad(p, ((0, 0), (pad, pad)))                     # zero padding
    conv = jnp.zeros((B, C), jnp.float32)
    for t in range(k):
        conv = conv + w[t] * p_pad[:, t:t + C]
    gate = jax.nn.sigmoid(conv).astype(x.dtype).reshape(B, C, 1)

    # ---------------- Pass 2: gating multiply in native dtype ----------------
    def _gate_kernel(x_ref, g_ref, o_ref):
        o_ref[...] = x_ref[...] * g_ref[...]                     # (tc,thw)*(tc,1)

    out_flat = pl.pallas_call(
        _gate_kernel,
        out_shape=jax.ShapeDtypeStruct((B, C, HW), x.dtype),
        grid_spec=pltpu.PrefetchScalarGridSpec(
            num_scalar_prefetch=0,
            grid=(B, n_c, n_hw),
            in_specs=[pl.BlockSpec((pl.Squeezed(), tc, thw),
                                   lambda b, c, h: (b, c, h)),
                      pl.BlockSpec((pl.Squeezed(), tc, 1),
                                   lambda b, c, h: (b, c, 0))],
            out_specs=pl.BlockSpec((pl.Squeezed(), tc, thw),
                                   lambda b, c, h: (b, c, h)),
        ),
        compiler_params=pltpu.CompilerParams(
            dimension_semantics=("parallel", "parallel", "parallel"),
            vmem_limit_bytes=_vmem_limit(2)),
        cost_estimate=pl.CostEstimate(
            flops=B * C * HW,
            transcendentals=0,
            bytes_accessed=2 * B * C * HW * itemsize + B * C * itemsize),
    )(x_flat, gate)

    return out_flat.reshape(B, C, H, W)


def eca_reference(x, conv_weight):
    """Pure-JAX reference matching the PyTorch forward."""
    B, C, H, W = x.shape
    k = conv_weight.shape[-1]
    pad = (k - 1) // 2
    pooled = jnp.mean(x.astype(jnp.float32), axis=(2, 3))        # (B, C)
    pooled_p = jnp.pad(pooled, ((0, 0), (pad, pad)))
    w = conv_weight.reshape(k).astype(jnp.float32)
    conv = jnp.zeros((B, C), dtype=jnp.float32)
    for t in range(k):
        conv = conv + w[t] * pooled_p[:, t:t + C]
    gate = jax.nn.sigmoid(conv).astype(x.dtype)[:, :, None, None]
    return x * gate


if __name__ == "__main__":
    key = jax.random.PRNGKey(0)
    B, C, H, W = 2, 4, 16, 16

    # ECA adaptive kernel size (c1=C, b=1, gamma=2):
    b_param = 1
    kernel_size = int(abs(math.log(C, 2) + b_param))
    kernel_size = kernel_size if kernel_size % 2 else kernel_size + 1

    kx, kw = jax.random.split(key)
    x = jax.random.normal(kx, (B, C, H, W), dtype=jnp.float32)
    # Deterministic synthetic Conv1d weight, shape (out=1, in=1, k), no bias.
    conv_weight = jax.random.normal(kw, (1, 1, kernel_size), dtype=jnp.float32) * 0.5

    out = eca_attention(x, conv_weight)
    out = jax.block_until_ready(out)

    ref = eca_reference(x, conv_weight)
    assert out.shape == (B, C, H, W)
    assert jnp.allclose(out, ref, atol=1e-5, rtol=1e-5), (
        float(jnp.max(jnp.abs(out - ref))))

    print("KERNEL_OK")
</pallas_src>

<mosaic_0001>
module attributes {stable_mosaic.version = 11 : i64} {
  func.func @_pool_kernel(%arg0: i32, %arg1: i32, %arg2: i32, %arg3: memref<1x4x256xf32, #tpu.memory_space<vmem>>, %arg4: memref<1x4x1xf32, #tpu.memory_space<vmem>>, %arg5: memref<4x1xf32, #tpu.memory_space<vmem>>) attributes {dimension_semantics = [#tpu.dimension_semantics<parallel>, #tpu.dimension_semantics<parallel>, #tpu.dimension_semantics<arbitrary>], iteration_bounds = array<i64: 2, 1, 1>, scalar_prefetch = 0 : i64, scratch_operands = 1 : i64, tpu.core_type = #tpu.core_type<tc>, window_params = [{transform_indices = @transform_0, window_bounds = array<i64: 1, 4, 256>}, {transform_indices = @transform_1, window_bounds = array<i64: 1, 4, 1>}]} {
    %c0_i32 = arith.constant 0 : i32
    %0 = arith.cmpi eq, %arg2, %c0_i32 : i32
    %1 = arith.extui %0 : i1 to i32
    %c0_i32_0 = arith.constant 0 : i32
    %2 = arith.cmpi ne, %1, %c0_i32_0 : i32
    scf.if %2 {
      %cst_9 = arith.constant 0.000000e+00 : f32
      %13 = vector.broadcast %cst_9 : f32 to vector<4x1xf32>
      %c0_10 = arith.constant 0 : index
      %c0_11 = arith.constant 0 : index
      %14 = vector.load %arg5[%c0_10, %c0_11] : memref<4x1xf32, #tpu.memory_space<vmem>>, vector<4x1xf32>
      tpu.vector_store %arg5[%c0_10, %c0_11], %13 {strides = array<i32>} : memref<4x1xf32, #tpu.memory_space<vmem>>, vector<4x1xf32>,
    } else {
    }
    %c0 = arith.constant 0 : index
    %c0_1 = arith.constant 0 : index
    %c0_2 = arith.constant 0 : index
    %3 = vector.load %arg3[%c0, %c0_1, %c0_2] : memref<1x4x256xf32, #tpu.memory_space<vmem>>, vector<1x4x256xf32>
    %4 = vector.shape_cast %3 : vector<1x4x256xf32> to vector<4x256xf32>
    %c0_3 = arith.constant 0 : index
    %c0_4 = arith.constant 0 : index
    %5 = vector.load %arg5[%c0_3, %c0_4] : memref<4x1xf32, #tpu.memory_space<vmem>>, vector<4x1xf32>
    %cst = arith.constant dense<0.000000e+00> : vector<4xf32>
    %6 = vector.multi_reduction <add>, %4, %cst [1] : vector<4x256xf32> to vector<4xf32>
    %7 = vector.shape_cast %6 : vector<4xf32> to vector<4x1xf32>
    %8 = arith.addf %5, %7 : vector<4x1xf32>
    %c0_5 = arith.constant 0 : index
    %c0_6 = arith.constant 0 : index
    %9 = vector.load %arg5[%c0_5, %c0_6] : memref<4x1xf32, #tpu.memory_space<vmem>>, vector<4x1xf32>
    tpu.vector_store %arg5[%c0_5, %c0_6], %8 {strides = array<i32>} : memref<4x1xf32, #tpu.memory_space<vmem>>, vector<4x1xf32>,
    %c0_i32_7 = arith.constant 0 : i32
    %10 = arith.cmpi eq, %arg2, %c0_i32_7 : i32
    %11 = arith.extui %10 : i1 to i32
    %c0_i32_8 = arith.constant 0 : i32
    %12 = arith.cmpi ne, %11, %c0_i32_8 : i32
    scf.if %12 {
      %c0_9 = arith.constant 0 : index
      %c0_10 = arith.constant 0 : index
      %13 = vector.load %arg5[%c0_9, %c0_10] : memref<4x1xf32, #tpu.memory_space<vmem>>, vector<4x1xf32>
      %cst_11 = arith.constant 3.906250e-03 : f32
      %14 = vector.broadcast %cst_11 : f32 to vector<4x1xf32>
      %15 = arith.mulf %13, %14 : vector<4x1xf32>
      %c0_12 = arith.constant 0 : index
      %c0_13 = arith.constant 0 : index
      %c0_14 = arith.constant 0 : index
      %16 = vector.load %arg4[%c0_12, %c0_13, %c0_14] : memref<1x4x1xf32, #tpu.memory_space<vmem>>, vector<1x4x1xf32>
      %17 = vector.shape_cast %16 : vector<1x4x1xf32> to vector<4x1xf32>
      %18 = vector.shape_cast %15 : vector<4x1xf32> to vector<1x4x1xf32>
      tpu.vector_store %arg4[%c0_12, %c0_13, %c0_14], %18 {strides = array<i32>} : memref<1x4x1xf32, #tpu.memory_space<vmem>>, vector<1x4x1xf32>,
    } else {
    }
    return
  }
  func.func @transform_0(%arg0: i32, %arg1: i32, %arg2: i32) -> (i32, i32, i32) {
    %c0_i32 = arith.constant 0 : i32
    return %arg0, %arg1, %arg2 : i32, i32, i32
  }
  func.func @transform_1(%arg0: i32, %arg1: i32, %arg2: i32) -> (i32, i32, i32) {
    %c0_i32 = arith.constant 0 : i32
    %c0_i32_0 = arith.constant 0 : i32
    return %arg0, %arg1, %c0_i32 : i32, i32, i32
  }
}

</mosaic_0001>

<llo_original>
// kernel: tpu_custom_call.1
$region0: #{tpu_custom_call.1}
  #allocation0 [shape = 'u32[]', space=smem, size = 0x4, offset = 0x4, fixed_abs, tag = 'smem constant byte address 0x4 - core index']
  #allocation1 [shape = 'u32[72,128]{1,0:T(1,128)}', space=vmem, size = 0x9000, scoped, tag = 'internal scratch']
  #allocation2 [shape = 'f32[4,1]{1,0:T(4,128)}', space=vmem, size = 0x800, scoped, tag = 'scratch operand']
  %s0 = inlined_call_operand.hbm [shape: f32[2,4,256], index: 0, kind: input, shape index: {}]
  %s1 = inlined_call_operand.vmem [shape: f32[2,4,1], index: 1, kind: output, shape index: {}]
  %s2 = sld [smem:[#allocation0]]
  $region49: #{tpu_custom_call.1} parent=0
    _
  %s4 = ssub.s32 1, %s2
  %s5 = scalar_select 0, %s4, %s2
  $region1: #{tpu_custom_call.1} parent=0
    #allocation3 [shape = 'u8[8192]{0}', space=vmem, size = 0x2000, scoped, tag = 'input window, operand 0']
    #allocation4 [shape = 's32[2]{0}', space=sflag, size = 0x8, scoped, tag = 'scoped memory for tpu_custom_call.1']
    %6 = vsyncpa [#allocation4], 0
    %s7 = scalar_lea.sflag [#allocation4], 1
    %8 = vsyncpa %s7, 0
    loop: start=0, step=1, limit=4
    $region2: #{tpu_custom_call.1} parent=1 // loop_pre_header
      _
    $region3: #{tpu_custom_call.1} parent=1 // loop_header
      %s10 = sphi 0, %s14
      %p11 = scmp.ge.s32.totalorder %s10, 4
      %s17 = sphi 0, %s36
      %s18 = sphi 0, %s32
      %s19 = sphi 0, %s28
      %s20 = sphi 0, %s17
      %s21 = sphi 0, %s18
      %s22 = sphi 0, %s19
      %s23 = sphi 0, %s20
      %s24 = sphi 0, %s21
      %s25 = sphi 0, %s22
      %s43 = sphi 0, %s45
      %s46 = sphi 0, %s43
      %s47 = sphi 0, %s46
      %s63 = sphi 0, %s47
      %s71 = sphi 0, %s73
      %s74 = sphi 0, %s71
      %s75 = sphi 0, %s74
      %s91 = sphi 0, %s75
    $region4: #{tpu_custom_call.1} parent=1 // loop_header_branch
      %13 = sbr.rel (%p11) target = $region8
    $region5: #{tpu_custom_call.1} parent=1 // loop_body
      %s15 = ssub.s32 %s10, 1
      %s16 = ssub.s32 %s10, 2
      %s26 = sadd.s32 1, %s19
      %p27 = scmp.ge.s32.totalorder %s26, 1
      %s28 = scalar_select %p27, 0, %s26
      %s29 = sadd.s32 1, %s18
      %s30 = scalar_select %p27, %s29, %s18
      %p31 = scmp.ge.s32.totalorder %s30, 1
      %s32 = scalar_select %p31, 0, %s30
      %s33 = sadd.s32 1, %s17
      %s34 = scalar_select %p31, %s33, %s17
      %p35 = scmp.ge.s32.totalorder %s34, 2
      %s36 = scalar_select %p35, 0, %s34
      %s37 = ssub.s32 %s17, %s36
      %s38 = ssub.s32 %s18, %s32
      %s39 = sor.u32 %s37, %s38
      %s40 = ssub.s32 %s19, %s28
      %s41 = sor.u32 %s39, %s40
      %p42 = scmp.eq.s32.totalorder %s41, 0
      %s44 = sadd.s32 %s43, 1
      %s45 = scalar_select %p42, %s43, %s44
      %p48 = pneg %p42
      %p49 = scmp.eq.s32.totalorder %s10, 1
      %p50 = por %p48, %p49
      %p51 = scmp.ne.s32.totalorder %s43, %s46
      %p52 = scmp.eq.s32.totalorder %s10, 0
      %p53 = por %p51, %p52
      %p54 = scmp.ne.s32.totalorder %s43, %s46
      %p55 = scmp.eq.s32.totalorder %s15, 1
      %p56 = por %p54, %p55
      %p57 = scmp.ne.s32.totalorder %s46, %s47
      %p58 = scmp.eq.s32.totalorder %s15, 0
      %p59 = por %p57, %p58
      %p60 = scmp.ne.s32.totalorder %s46, %s47
      %p61 = scmp.eq.s32.totalorder %s16, 1
      %p62 = por %p60, %p61
      %p64 = scmp.ne.s32.totalorder %s47, %s63
      %p65 = scmp.eq.s32.totalorder %s16, 0
      %p66 = por %p64, %p65
      %s67 = ssub.s32 %s17, %s36
      %s68 = ssub.s32 %s18, %s32
      %s69 = sor.u32 %s67, %s68
      %p70 = scmp.eq.s32.totalorder %s69, 0
      %s72 = sadd.s32 %s71, 1
      %s73 = scalar_select %p70, %s71, %s72
      %p76 = pneg %p70
      %p77 = scmp.eq.s32.totalorder %s10, 1
      %p78 = por %p76, %p77
      %p79 = scmp.ne.s32.totalorder %s71, %s74
      %p80 = scmp.eq.s32.totalorder %s10, 0
      %p81 = por %p79, %p80
      %p82 = scmp.ne.s32.totalorder %s71, %s74
      %p83 = scmp.eq.s32.totalorder %s15, 1
      %p84 = por %p82, %p83
      %p85 = scmp.ne.s32.totalorder %s74, %s75
      %p86 = scmp.eq.s32.totalorder %s15, 0
      %p87 = por %p85, %p86
      %p88 = scmp.ne.s32.totalorder %s74, %s75
      %p89 = scmp.eq.s32.totalorder %s16, 1
      %p90 = por %p88, %p89
      %p92 = scmp.ne.s32.totalorder %s75, %s91
      %p93 = scmp.eq.s32.totalorder %s16, 0
      %p94 = por %p92, %p93
      %p95 = scmp.le.s32.totalorder 1, %s10
      %p96 = scmp.lt.s32.totalorder %s10, 3
      %p97 = pnand %p95, %p96
      %p98 = pneg %p97
      // Predicated region
      $region9: #{tpu_custom_call.1} parent=5 // pred_check
        _
      $region10: #{tpu_custom_call.1} parent=5 // pred_check_branch
        %100 = sbr.rel (%p97) target = $region12
      $region11: #{tpu_custom_call.1} parent=5 // pred_region
        %s101 = ssub.s32 %s10, 1
      $region12: #{tpu_custom_call.1} parent=5 // pred_fallthru
        _
      %p102 = scmp.lt.s32.totalorder %s10, 2
      // Predicated region
      $region13: #{tpu_custom_call.1} parent=5 // pred_check
        %p103 = pneg %p102
      $region14: #{tpu_custom_call.1} parent=5 // pred_check_branch
        %105 = sbr.rel (%p103) target = $region16
      $region15: #{tpu_custom_call.1} parent=5 // pred_region
        // Predicated region
        $region17: #{tpu_custom_call.1} parent=15 // pred_check
          %p106 = pneg %p53
        $region18: #{tpu_custom_call.1} parent=15 // pred_check_branch
          %108 = sbr.rel (%p106) target = $region20
        $region19: #{tpu_custom_call.1} parent=15 // pred_region
          %s109 = sand.u32 %s43, 1
          %s110 = scalar_lea.sflag [#allocation4], %s109
          %s111 = sand.u32 %s43, 1
          %s112 = smul.addr %s111, 8
          %s113 = scalar_lea.vmem [#allocation3], %s112
          %s114 = smul.u32 2, %s19
          %116 = vsyncadd %s110, 0
          %s117 = smul.addr %s18, 2
          %s118 = sadd.s32 %s114, %s117
          %s119 = smul.addr %s17, 2
          %s120 = sadd.s32 %s118, %s119
          %s121 = smul.addr %s120, 4
          %s122 = scalar_lea.hbm %s0, %s121
          %s124 = sshll.u32 %s122, 4
          %s125 = int_to_ptr.hbm [resolvable:$true] %s124
          %s126 = sshll.u32 %s113, 4
          %s127 = int_to_ptr.vmem [resolvable:$true] %s126
          %129 = dma.hbm_to_vmem [thread:$0]  %s125, 128, %s127, %s110
        $region20: #{tpu_custom_call.1} parent=15 // pred_fallthru
          _
      $region16: #{tpu_custom_call.1} parent=5 // pred_fallthru
        _
      %p130 = scmp.le.s32.totalorder 1, %s10
      %p131 = scmp.lt.s32.totalorder %s10, 3
      %p132 = pnand %p130, %p131
      %p133 = pneg %p132
      // Predicated region
      $region21: #{tpu_custom_call.1} parent=5 // pred_check
        _
      $region22: #{tpu_custom_call.1} parent=5 // pred_check_branch
        %135 = sbr.rel (%p132) target = $region24
      $region23: #{tpu_custom_call.1} parent=5 // pred_region
        %s136 = ssub.s32 %s10, 1
        %s137 = sand.u32 %s46, 1
        %s138 = scalar_lea.sflag [#allocation4], %s137
        %s139 = sand.u32 %s46, 1
        %s140 = smul.addr %s139, 8
        %s141 = scalar_lea.vmem [#allocation3], %s140
        // Predicated region
        $region25: #{tpu_custom_call.1} parent=23 // pred_check
          %p142 = pneg %p59
        $region26: #{tpu_custom_call.1} parent=23 // pred_check_branch
          %144 = sbr.rel (%p142) target = $region28
        $region27: #{tpu_custom_call.1} parent=23 // pred_region
          %146 = dma.done %s138, 128
        $region28: #{tpu_custom_call.1} parent=23 // pred_fallthru
          _
        %s147 = sand.u32 %s46, 1
        %s148 = scalar_lea.sflag [#allocation4], %s147
        %s149 = sand.u32 %s46, 1
        %s150 = smul.addr %s149, 8
        %s151 = scalar_lea.vmem [#allocation3], %s150
        %p152 = pneg %p59
        %p153 = pneg %p56
        %p154 = pneg %p87
        %p155 = pneg %p84
        %p156 = scmp.lt.s32.totalorder %s20, 1
        %s157 = scalar_select %p156, %s20, 1
        %p158 = scmp.lt.s32.totalorder %s21, 0
        %s159 = scalar_select %p158, %s21, 0
        %s160 = sadd.s32 %s159, %s157
        %s161 = smul.addr %s160, 4
        %s162 = scalar_lea.vmem %s1, %s161
        %s163 = smul.u32 2, %s22
        %p164 = scmp.lt.s32.totalorder %s20, 1
        %s165 = scalar_select %p164, %s20, 1
        %p166 = scmp.lt.s32.totalorder %s21, 0
        %s167 = scalar_select %p166, %s21, 0
        %s168 = sadd.s32 %s167, %s165
        %s169 = smul.addr %s168, 4
        %s170 = scalar_lea.vmem %s1, %s169
        %p171 = scmp.eq.s32.totalorder %s22, 0
        // Predicated region
        $region29: #{tpu_custom_call.1} parent=23 // pred_check
          %p172 = pneg %p171
        $region30: #{tpu_custom_call.1} parent=23 // pred_check_branch
          %174 = sbr.rel (%p172) target = $region32
        $region31: #{tpu_custom_call.1} parent=23 // pred_region
          %vm175 = vcmask 3072
          %176 = vst.msk [vmem:[#allocation2] sm:$0xf] %vm175, 0.0
        $region32: #{tpu_custom_call.1} parent=23 // pred_fallthru
          _
        %v177 = vld [vmem:[%s141] sm:$0xff]
        %v178 = vld [vmem:[#allocation2] sm:$0xf]
        %180 = vst [vmem:[#allocation1] ss:$2 sm:$0xff] %v177
        %v181 = vld.sshfl [vmem:[#allocation1] sm:$0xff pattern:$0x75316420]
        %v182 = vld.sshfl [vmem:[#allocation1 + $0x8] sm:$0xff pattern:$0x75316420]
        %vm185 = vcmask 1043456
        %v186 = vsel %vm185, %v181, 0.0
        %v187 = vsel %vm185, %v182, 0.0
        %v188 = vadd.f32 %v186, %v187
        %189 = vadd.xlane.f32.xlu0 %v188
        %v190 = vpop.xlane.xlu0 %189
        %v191 = vadd.f32 %v178, %v190
        %vm192 = vcmask 3072
        %193 = vst.msk [vmem:[#allocation2] sm:$0xf] %vm192, %v191
        // Predicated region
        $region33: #{tpu_custom_call.1} parent=23 // pred_check
          %p194 = pneg %p171
        $region34: #{tpu_custom_call.1} parent=23 // pred_check_branch
          %196 = sbr.rel (%p194) target = $region36
        $region35: #{tpu_custom_call.1} parent=23 // pred_region
          %v197 = vld [vmem:[#allocation2] sm:$0xf]
          %v198 = vmul.f32 %v197, 0.00390625
          %199 = vst.msk [vmem:[%s170] sm:$0xf] %vm192, %v198
        $region36: #{tpu_custom_call.1} parent=23 // pred_fallthru
          _
        %p200 = scmp.lt.s32.totalorder %s20, 1
        %s201 = scalar_select %p200, %s20, 1
        %p202 = scmp.lt.s32.totalorder %s21, 0
        %s203 = scalar_select %p202, %s21, 0
        %s204 = sadd.s32 %s203, %s201
        %s205 = smul.addr %s204, 4
        %s206 = scalar_lea.vmem %s1, %s205
        // Predicated region
        $region37: #{tpu_custom_call.1} parent=23 // pred_check
          %p207 = pneg %p84
        $region38: #{tpu_custom_call.1} parent=23 // pred_check_branch
          %209 = sbr.rel (%p207) target = $region40
        $region39: #{tpu_custom_call.1} parent=23 // pred_region
          _
        $region40: #{tpu_custom_call.1} parent=23 // pred_fallthru
          _
      $region24: #{tpu_custom_call.1} parent=5 // pred_fallthru
        _
      %p210 = scmp.le.s32.totalorder 2, %s10
      // Predicated region
      $region41: #{tpu_custom_call.1} parent=5 // pred_check
        %p211 = pneg %p210
      $region42: #{tpu_custom_call.1} parent=5 // pred_check_branch
        %213 = sbr.rel (%p211) target = $region44
      $region43: #{tpu_custom_call.1} parent=5 // pred_region
        %s214 = ssub.s32 %s10, 2
        // Predicated region
        $region45: #{tpu_custom_call.1} parent=43 // pred_check
          %p215 = pneg %p90
        $region46: #{tpu_custom_call.1} parent=43 // pred_check_branch
          %217 = sbr.rel (%p215) target = $region48
        $region47: #{tpu_custom_call.1} parent=43 // pred_region
          %p218 = scmp.lt.s32.totalorder %s23, 1
          %s219 = scalar_select %p218, %s23, 1
          %p220 = scmp.lt.s32.totalorder %s24, 0
          %s221 = scalar_select %p220, %s24, 0
          %s222 = sadd.s32 %s221, %s219
          %s223 = smul.addr %s222, 4
          %s224 = scalar_lea.vmem %s1, %s223
        $region48: #{tpu_custom_call.1} parent=43 // pred_fallthru
          _
      $region44: #{tpu_custom_call.1} parent=5 // pred_fallthru
        _
    $region6: #{tpu_custom_call.1} parent=1 // loop_footer
      %s14 = sadd.s32 1, %s10
    $region7: #{tpu_custom_call.1} parent=1 // loop_footer_branch
      %9 = sbr.rel target = $region3
    $region8: #{tpu_custom_call.1} parent=1 // loop_exit
      _
    %225 = vsyncpa [#allocation4], 1
    %s226 = scalar_lea.sflag [#allocation4], 1
    %227 = vsyncpa %s226, 1

</llo_original>
